<compile_context>
chip_gen: v6e
topology: v6e:2x2x1
jax: 0.10.0
libtpu: 0.0.40
codegen_flags: <defaults>
</compile_context>

<pallas_src>
import jax
import jax.numpy as jnp
from jax.experimental import pallas as pl
from jax.experimental.pallas import tpu as pltpu


# ----------------------------------------------------------------------------- kernels
def _linear_kernel_f32out(x_ref, w_ref, b_ref, o_ref):
    """f32 output: accumulate directly into the VMEM-resident output block."""
    k = pl.program_id(2)

    @pl.when(k == 0)
    def _():
        # Seed the output tile with the (broadcast) bias once per (i, j) block.
        o_ref[...] = jnp.broadcast_to(b_ref[...], o_ref.shape).astype(o_ref.dtype)

    # x_ref: (tm, tk), w_ref: (tk, tn)  -> canonical MXU matmul, f32 accumulate.
    o_ref[...] += jnp.dot(x_ref[...], w_ref[...], preferred_element_type=jnp.float32)


def _linear_kernel_acc(x_ref, w_ref, b_ref, o_ref, acc_ref):
    """Narrow output dtype (e.g. bf16): f32 scratch accumulator, cast at the end."""
    k = pl.program_id(2)

    @pl.when(k == 0)
    def _():
        acc_ref[...] = jnp.zeros_like(acc_ref)

    acc_ref[...] += jnp.dot(x_ref[...], w_ref[...], preferred_element_type=jnp.float32)

    @pl.when(k == pl.num_programs(2) - 1)
    def _():
        o_ref[...] = (acc_ref[...] + b_ref[...].astype(jnp.float32)).astype(o_ref.dtype)


# ----------------------------------------------------------------------------- tiling
def _round_up(x: int, m: int) -> int:
    return ((x + m - 1) // m) * m


def _pick_tile(dim: int, cap: int, granule: int):
    """Return (tile, padded_dim).

    If the dim fits in one block, use the full dim (no padding, legal under the
    (8,128) rule because the block equals the full array dim).  Otherwise pick
    the largest granule-multiple tile <= cap that evenly divides the
    granule-rounded dim (keeps padding <= granule-1 elements).
    """
    if dim <= cap:
        return dim, dim
    padded = _round_up(dim, granule)
    t = (cap // granule) * granule
    while t >= granule:
        if padded % t == 0:
            return t, padded
        t -= granule
    return granule, padded  # unreachable (granule always divides padded)


def _pick_tiles(M: int, K: int, N: int):
    tm, M_pad = _pick_tile(M, 512, 8)      # second-to-last dims: 8-granular
    tk, K_pad = _pick_tile(K, 1024, 128)   # lane dim of X / sublane dim of W
    tn, N_pad = _pick_tile(N, 512, 128)    # lane dim of W / bias / out

    # v7x has 2 TensorCores splitting the "parallel" grid axes; make sure the
    # output grid exposes >= 2 blocks when the problem allows it.
    if (M_pad // tm) * (N_pad // tn) == 1:
        if N >= 256 and N % 256 == 0:
            tn = N // 2
        elif M >= 16 and M % 16 == 0:
            tm = M // 2
    return tm, tk, tn, M_pad, K_pad, N_pad


# ----------------------------------------------------------------------------- wrapper
@jax.jit
def model_nn_forward(x, weight, bias):
    """Equivalent of Model_NN(nn.Linear(in_f, out_f)).forward(x).

    x:      [..., in_features]
    weight: [out_features, in_features]   (PyTorch nn.Linear layout)
    bias:   [out_features]
    returns [..., out_features] in x.dtype
    """
    orig_shape = x.shape
    K = orig_shape[-1]
    N = weight.shape[0]
    x2 = x.reshape(-1, K)
    M = x2.shape[0]

    compute_dtype = x2.dtype
    out_dtype = x2.dtype
    itemsize = jnp.dtype(compute_dtype).itemsize

    # One-time layout / dtype change for the parameter: [out,in] -> [in,out]
    # (MXU-canonical RHS).  For a persistent parameter this is amortized; it
    # replaces a per-K-step XLU transpose inside the kernel.
    w_kn = weight.astype(compute_dtype).T            # [K, N]

    tm, tk, tn, M_pad, K_pad, N_pad = _pick_tiles(M, K, N)

    # Pad only when a dim spans multiple blocks and is not already a multiple
    # of its tile; zero K-padding is a no-op for the accumulation.
    if (M_pad, K_pad) != (M, K):
        x2 = jnp.pad(x2, ((0, M_pad - M), (0, K_pad - K)))
    if (K_pad, N_pad) != (K, N):
        w_kn = jnp.pad(w_kn, ((0, K_pad - K), (0, N_pad - N)))
    b2 = bias.reshape(1, N)
    if N_pad != N:
        b2 = jnp.pad(b2, ((0, 0), (0, N_pad - N)))

    grid_m, grid_n, grid_k = M_pad // tm, N_pad // tn, K_pad // tk
    grid = (grid_m, grid_n, grid_k)

    # f32 outputs: accumulate straight into the resident output block (no scratch).
    use_scratch = out_dtype != jnp.float32
    kernel = _linear_kernel_acc if use_scratch else _linear_kernel_f32out
    scratch_shapes = [pltpu.VMEM((tm, tn), jnp.float32)] if use_scratch else []

    # Double-buffered VMEM footprint + headroom; explicit limit so bigger tiles
    # never trip v5e's 16 MiB scoped default, while staying well inside v7x's
    # 64 MiB-per-TC physical VMEM.
    footprint = 2 * (tm * tk + tk * tn + tn) * itemsize + 2 * tm * tn * itemsize
    if use_scratch:
        footprint += tm * tn * 4
    vmem_limit = min(max(footprint + (8 << 20), 32 << 20), 48 << 20)

    # Advisory cost from LOGICAL sizes, including HBM re-streaming factors.
    flops = 2 * M * K * N
    bytes_accessed = itemsize * (M * K * grid_n + K * N * grid_m + M * N) + 4 * N

    out = pl.pallas_call(
        kernel,
        out_shape=jax.ShapeDtypeStruct((M_pad, N_pad), out_dtype),
        grid_spec=pltpu.PrefetchScalarGridSpec(
            num_scalar_prefetch=0,
            grid=grid,
            in_specs=[
                pl.BlockSpec((tm, tk), lambda i, j, k: (i, k)),   # X tile
                pl.BlockSpec((tk, tn), lambda i, j, k: (k, j)),   # W tile, [K, N] layout
                pl.BlockSpec((1, tn), lambda i, j, k: (0, j)),    # bias tile
            ],
            out_specs=pl.BlockSpec((tm, tn), lambda i, j, k: (i, j)),
            scratch_shapes=scratch_shapes,
        ),
        compiler_params=pltpu.CompilerParams(
            dimension_semantics=("parallel", "parallel", "arbitrary"),
            vmem_limit_bytes=int(vmem_limit),
        ),
        cost_estimate=pl.CostEstimate(
            flops=flops, transcendentals=0, bytes_accessed=int(bytes_accessed)
        ),
    )(x2, w_kn, b2)

    if (M_pad, N_pad) != (M, N):
        out = out[:M, :N]
    return out.reshape(*orig_shape[:-1], N)


# ----------------------------------------------------------------------------- test
if __name__ == "__main__":
    # Small shapes consistent with the module: batch=8, in_features=32, out_features=128.
    # At this toy size the grid is a single block and no padding/slicing happens.
    B, IN_F, OUT_F = 8, 32, 128

    key = jax.random.PRNGKey(0)
    kx, kw, kb = jax.random.split(key, 3)

    x = jax.random.normal(kx, (B, IN_F), dtype=jnp.float32)
    # Deterministic parameter init (mimics PyTorch's uniform(-1/sqrt(in), 1/sqrt(in))).
    bound = 1.0 / jnp.sqrt(jnp.float32(IN_F))
    weight = jax.random.uniform(kw, (OUT_F, IN_F), dtype=jnp.float32,
                                minval=-bound, maxval=bound)
    bias = jax.random.uniform(kb, (OUT_F,), dtype=jnp.float32,
                              minval=-bound, maxval=bound)

    y_ref = x @ weight.T + bias

    # f32 path (direct output-block accumulation, tight tolerance).
    y = jax.block_until_ready(model_nn_forward(x, weight, bias))
    assert y.shape == (B, OUT_F)
    assert jnp.allclose(y, y_ref, atol=1e-5, rtol=1e-5)

    # bf16 path (MXU-native operands, f32 accumulate, scratch epilogue).
    y_bf16 = jax.block_until_ready(
        model_nn_forward(x.astype(jnp.bfloat16), weight, bias))
    assert y_bf16.dtype == jnp.bfloat16
    assert jnp.allclose(y_bf16.astype(jnp.float32), y_ref, atol=5e-2, rtol=5e-2)

    print("KERNEL_OK")
</pallas_src>

<mosaic_0001>
module attributes {stable_mosaic.version = 11 : i64} {
  func.func @_linear_kernel_f32out(%arg0: i32, %arg1: i32, %arg2: i32, %arg3: memref<8x32xf32, #tpu.memory_space<vmem>>, %arg4: memref<32x128xf32, #tpu.memory_space<vmem>>, %arg5: memref<1x128xf32, #tpu.memory_space<vmem>>, %arg6: memref<8x128xf32, #tpu.memory_space<vmem>>) attributes {dimension_semantics = [#tpu.dimension_semantics<parallel>, #tpu.dimension_semantics<parallel>, #tpu.dimension_semantics<arbitrary>], iteration_bounds = array<i64: 1, 1, 1>, scalar_prefetch = 0 : i64, scratch_operands = 0 : i64, tpu.core_type = #tpu.core_type<tc>, window_params = [{transform_indices = @transform_0, window_bounds = array<i64: 8, 32>}, {transform_indices = @transform_1, window_bounds = array<i64: 32, 128>}, {transform_indices = @transform_2, window_bounds = array<i64: 1, 128>}, {transform_indices = @transform_3, window_bounds = array<i64: 8, 128>}]} {
    %c0_i32 = arith.constant 0 : i32
    %0 = arith.cmpi eq, %arg2, %c0_i32 : i32
    %1 = arith.extui %0 : i1 to i32
    %c0_i32_0 = arith.constant 0 : i32
    %2 = arith.cmpi ne, %1, %c0_i32_0 : i32
    scf.if %2 {
      %c0_8 = arith.constant 0 : index
      %c0_9 = arith.constant 0 : index
      %9 = vector.load %arg5[%c0_8, %c0_9] : memref<1x128xf32, #tpu.memory_space<vmem>>, vector<1x128xf32>
      %10 = vector.shape_cast %9 : vector<1x128xf32> to vector<1x128xf32>
      %11 = vector.broadcast %10 : vector<1x128xf32> to vector<8x128xf32>
      %c0_10 = arith.constant 0 : index
      %c0_11 = arith.constant 0 : index
      %12 = vector.load %arg6[%c0_10, %c0_11] : memref<8x128xf32, #tpu.memory_space<vmem>>, vector<8x128xf32>
      tpu.vector_store %arg6[%c0_10, %c0_11], %11 {strides = array<i32>} : memref<8x128xf32, #tpu.memory_space<vmem>>, vector<8x128xf32>,
    } else {
    }
    %c0 = arith.constant 0 : index
    %c0_1 = arith.constant 0 : index
    %3 = vector.load %arg6[%c0, %c0_1] : memref<8x128xf32, #tpu.memory_space<vmem>>, vector<8x128xf32>
    %c0_2 = arith.constant 0 : index
    %c0_3 = arith.constant 0 : index
    %4 = vector.load %arg3[%c0_2, %c0_3] : memref<8x32xf32, #tpu.memory_space<vmem>>, vector<8x32xf32>
    %c0_4 = arith.constant 0 : index
    %c0_5 = arith.constant 0 : index
    %5 = vector.load %arg4[%c0_4, %c0_5] : memref<32x128xf32, #tpu.memory_space<vmem>>, vector<32x128xf32>
    %cst = arith.constant dense<0.000000e+00> : vector<8x128xf32>
    %6 = tpu.matmul %4, %5, %cst {dimension_numbers = #tpu.dot_dimension_numbers<[1], [0], [0], [1], [0, 0, 1, 1], [], []>} : vector<8x32xf32>, vector<32x128xf32>, vector<8x128xf32> -> vector<8x128xf32>
    %7 = arith.addf %3, %6 : vector<8x128xf32>
    %c0_6 = arith.constant 0 : index
    %c0_7 = arith.constant 0 : index
    %8 = vector.load %arg6[%c0_6, %c0_7] : memref<8x128xf32, #tpu.memory_space<vmem>>, vector<8x128xf32>
    tpu.vector_store %arg6[%c0_6, %c0_7], %7 {strides = array<i32>} : memref<8x128xf32, #tpu.memory_space<vmem>>, vector<8x128xf32>,
    return
  }
  func.func @transform_0(%arg0: i32, %arg1: i32, %arg2: i32) -> (i32, i32) {
    %c0_i32 = arith.constant 0 : i32
    return %arg0, %arg2 : i32, i32
  }
  func.func @transform_1(%arg0: i32, %arg1: i32, %arg2: i32) -> (i32, i32) {
    %c0_i32 = arith.constant 0 : i32
    return %arg2, %arg1 : i32, i32
  }
  func.func @transform_2(%arg0: i32, %arg1: i32, %arg2: i32) -> (i32, i32) {
    %c0_i32 = arith.constant 0 : i32
    %c0_i32_0 = arith.constant 0 : i32
    return %c0_i32, %arg1 : i32, i32
  }
  func.func @transform_3(%arg0: i32, %arg1: i32, %arg2: i32) -> (i32, i32) {
    %c0_i32 = arith.constant 0 : i32
    return %arg0, %arg1 : i32, i32
  }
}

</mosaic_0001>

<llo_original>
// kernel: model_nn_forward.1
$region0: #{model_nn_forward.1}
  #allocation0 [shape = 'u32[]', space=smem, size = 0x4, offset = 0x4, fixed_abs, tag = 'smem constant byte address 0x4 - core index']
  #allocation1 [shape = 'u32[144,128]{1,0:T(1,128)}', space=vmem, size = 0x12000, scoped, tag = 'internal scratch']
  %s0 = inlined_call_operand.hbm [shape: f32[8,32], index: 0, kind: input, shape index: {}]
  %s1 = inlined_call_operand.hbm [shape: f32[32,128], index: 1, kind: input, shape index: {}]
  %s2 = inlined_call_operand.vmem [shape: f32[1,128], index: 2, kind: input, shape index: {}]
  %s3 = inlined_call_operand.hbm [shape: f32[8,128], index: 3, kind: output, shape index: {}]
  %s4 = sld [smem:[#allocation0]]
  $region34: #{model_nn_forward.1} parent=0
    _
  %s6 = ssub.s32 1, %s4
  %s7 = scalar_select 0, %s6, %s4
  $region1: #{model_nn_forward.1} parent=0
    #allocation2 [shape = 'u8[4096]{0}', space=vmem, size = 0x1000, scoped, tag = 'input window, operand 0, single buffered']
    #allocation3 [shape = 's32[1]{0}', space=sflag, size = 0x4, scoped, tag = 'scoped memory for model_nn_forward.1']
    #allocation4 [shape = 's32[1]{0}', space=sflag, size = 0x4, scoped, tag = 'scoped memory for model_nn_forward.1']
    #allocation5 [shape = 'u8[16384]{0}', space=vmem, size = 0x4000, scoped, tag = 'input window, operand 1, single buffered']
    #allocation6 [shape = 's32[1]{0}', space=sflag, size = 0x4, scoped, tag = 'scoped memory for model_nn_forward.1']
    #allocation7 [shape = 'u8[4096]{0}', space=vmem, size = 0x1000, scoped, tag = 'output window, operand 0, single buffered']
    %8 = vsyncpa [#allocation3], 0
    %9 = vsyncpa [#allocation6], 0
    %10 = vsyncpa [#allocation4], 0
    // Predicated region
    $region2: #{model_nn_forward.1} parent=1 // pred_check
      _
    $region3: #{model_nn_forward.1} parent=1 // pred_check_branch
      %12 = sbr.rel (0) target = $region5
    $region4: #{model_nn_forward.1} parent=1 // pred_region
      %s14 = ssub.s32 128, 128
      %15 = vsyncadd [#allocation3], %s14
      %s17 = sshll.u32 [#allocation2], 4
      %s18 = int_to_ptr.vmem [resolvable:$true] %s17
      %20 = dma.hbm_to_vmem [thread:$0]  %s0, 128, %s18, [#allocation3]
    $region5: #{model_nn_forward.1} parent=1 // pred_fallthru
      _
    // Predicated region
    $region6: #{model_nn_forward.1} parent=1 // pred_check
      _
    $region7: #{model_nn_forward.1} parent=1 // pred_check_branch
      %22 = sbr.rel (0) target = $region9
    $region8: #{model_nn_forward.1} parent=1 // pred_region
      %s24 = ssub.s32 512, 512
      %25 = vsyncadd [#allocation6], %s24
      %s26 = sshll.u32 [#allocation5], 4
      %s27 = int_to_ptr.vmem [resolvable:$true] %s26
      %32 = dma.hbm_to_vmem [thread:$0]  %s1, 512, %s27, [#allocation6], 128, 128, 8
    $region9: #{model_nn_forward.1} parent=1 // pred_fallthru
      _
    // Predicated region
    $region10: #{model_nn_forward.1} parent=1 // pred_check
      _
    $region11: #{model_nn_forward.1} parent=1 // pred_check_branch
      %34 = sbr.rel (0) target = $region13
    $region12: #{model_nn_forward.1} parent=1 // pred_region
      _
    $region13: #{model_nn_forward.1} parent=1 // pred_fallthru
      _
    // Predicated region
    $region14: #{model_nn_forward.1} parent=1 // pred_check
      _
    $region15: #{model_nn_forward.1} parent=1 // pred_check_branch
      %36 = sbr.rel (0) target = $region17
    $region16: #{model_nn_forward.1} parent=1 // pred_region
      %37 = dma.done [#allocation3], 128
    $region17: #{model_nn_forward.1} parent=1 // pred_fallthru
      _
    // Predicated region
    $region18: #{model_nn_forward.1} parent=1 // pred_check
      _
    $region19: #{model_nn_forward.1} parent=1 // pred_check_branch
      %39 = sbr.rel (0) target = $region21
    $region20: #{model_nn_forward.1} parent=1 // pred_region
      %40 = dma.done [#allocation6], 512
    $region21: #{model_nn_forward.1} parent=1 // pred_fallthru
      _
    %p41 = scmp.eq.s32.totalorder 0, 0
    // Predicated region
    $region22: #{model_nn_forward.1} parent=1 // pred_check
      %p42 = pneg %p41
    $region23: #{model_nn_forward.1} parent=1 // pred_check_branch
      %44 = sbr.rel (%p42) target = $region25
    $region24: #{model_nn_forward.1} parent=1 // pred_region
      %v45 = vld [vmem:[%s2] sm:$0x1]
      %v47 = vlaneseq
      %v48 = vshrl.u32 %v47, 7
      %v49 = vsub.s32 0, %v48
      %v50 = vrot.slane %v45, %v49
      %52 = vst [vmem:[#allocation7] sm:$0xff] %v50
    $region25: #{model_nn_forward.1} parent=1 // pred_fallthru
      _
    %v53 = vld [vmem:[#allocation7] sm:$0xff]
    %v54 = vld [vmem:[#allocation2] sm:$0xff]
    %v55 = vld [vmem:[#allocation5] sm:$0xff]
    %v56 = vld [vmem:[#allocation5 + $0x8] sm:$0xff]
    %v57 = vld [vmem:[#allocation5 + $0x10] sm:$0xff]
    %v58 = vld [vmem:[#allocation5 + $0x18] sm:$0xff]
    %vm59 = vcmask 261120
    %v61 = vsel %vm59, %v54, 0
    %63 = vmatprep.subr.mxu0 0.0
    %64 = vmatpush1.msra.mxu0 0.0
    %65 = vmatprep.subr.mxu0 0.0
    %66 = vmatpush1.msra.mxu0 0.0
    %67 = vmatprep.subr.mxu0 0.0
    %68 = vmatpush1.msra.mxu0 0.0
    %69 = vmatprep.subr.mxu0 0.0
    %70 = vmatpush1.msra.mxu0 0.0
    %71 = vmatprep.subr.mxu0 0.0
    %72 = vmatpush1.msra.mxu0 0.0
    %73 = vmatprep.subr.mxu0 0.0
    %74 = vmatpush1.msra.mxu0 0.0
    %75 = vmatprep.subr.mxu0 0.0
    %76 = vmatpush1.msra.mxu0 0.0
    %77 = vmatprep.subr.mxu0 0.0
    %78 = vmatpush1.msra.mxu0 0.0
    %79 = vmatprep.subr.mxu0 0.0
    %80 = vmatpush1.msra.mxu0 0.0
    %81 = vmatprep.subr.mxu0 0.0
    %82 = vmatpush1.msra.mxu0 0.0
    %83 = vmatprep.subr.mxu0 0.0
    %84 = vmatpush1.msra.mxu0 0.0
    %85 = vmatprep.subr.mxu0 0.0
    %86 = vmatpush1.msra.mxu0 0.0
    %87 = vmatprep.subr.mxu0 0.0
    %88 = vmatpush1.msra.mxu0 %v58
    %89 = vmatprep.subr.mxu0 0.0
    %90 = vmatpush1.msra.mxu0 %v57
    %91 = vmatprep.subr.mxu0 0.0
    %92 = vmatpush1.msra.mxu0 %v56
    %93 = vmatprep.subr.mxu0 0.0
    %94 = vmatpush1.msra.mxu0 %v55
    %95 = vmatprep.subr.mxu0 0.0
    %96 = vmatpush2.msra.mxu0 0.0
    %97 = vmatprep.subr.mxu0 0.0
    %98 = vmatpush2.msra.mxu0 0.0
    %99 = vmatprep.subr.mxu0 0.0
    %100 = vmatpush2.msra.mxu0 0.0
    %101 = vmatprep.subr.mxu0 0.0
    %102 = vmatpush2.msra.mxu0 0.0
    %103 = vmatprep.subr.mxu0 0.0
    %104 = vmatpush2.msra.mxu0 0.0
    %105 = vmatprep.subr.mxu0 0.0
    %106 = vmatpush2.msra.mxu0 0.0
    %107 = vmatprep.subr.mxu0 0.0
    %108 = vmatpush2.msra.mxu0 0.0
    %109 = vmatprep.subr.mxu0 0.0
    %110 = vmatpush2.msra.mxu0 0.0
    %111 = vmatprep.subr.mxu0 0.0
    %112 = vmatpush2.msra.mxu0 0.0
    %113 = vmatprep.subr.mxu0 0.0
    %114 = vmatpush2.msra.mxu0 0.0
    %115 = vmatprep.subr.mxu0 0.0
    %116 = vmatpush2.msra.mxu0 0.0
    %117 = vmatprep.subr.mxu0 0.0
    %118 = vmatpush2.msra.mxu0 0.0
    %119 = vmatprep.subr.mxu0 0.0
    %120 = vmatpush2.msra.mxu0 0.0
    %121 = vmatprep.subr.mxu0 0.0
    %122 = vmatpush2.msra.mxu0 0.0
    %123 = vmatprep.subr.mxu0 0.0
    %124 = vmatpush2.msra.mxu0 0.0
    %125 = vmatprep.subr.mxu0 0.0
    %126 = vmatpush2.msra.mxu0 0.0
    %127 = vmatprep.mubr.f32.mxu0 0.0
    %128 = vmatmul.mubr.f32.gmra.mxu0 %v61
    %v129 = vpop.f32.mrf.mxu0
    %v130 = vadd.f32 0.0, %v129
    %v131 = vpop.f32.mrf.mxu0
    %132 = vdwg.mxu0
    %v133 = vadd.f32 %v53, %v130
    %134 = vst [vmem:[#allocation7] sm:$0xff] %v133
    // Predicated region
    $region26: #{model_nn_forward.1} parent=1 // pred_check
      _
    $region27: #{model_nn_forward.1} parent=1 // pred_check_branch
      %136 = sbr.rel (0) target = $region29
    $region28: #{model_nn_forward.1} parent=1 // pred_region
      %s138 = ssub.s32 128, 128
      %139 = vsyncadd [#allocation4], %s138
      %s141 = sshll.u32 [#allocation7], 4
      %s142 = int_to_ptr.vmem [resolvable:$true] %s141
      %144 = dma.vmem_to_hbm [thread:$0]  %s142, 128, %s3, [#allocation4]
    $region29: #{model_nn_forward.1} parent=1 // pred_fallthru
      _
    // Predicated region
    $region30: #{model_nn_forward.1} parent=1 // pred_check
      _
    $region31: #{model_nn_forward.1} parent=1 // pred_check_branch
      %146 = sbr.rel (0) target = $region33
    $region32: #{model_nn_forward.1} parent=1 // pred_region
      %147 = dma.done [#allocation4], 128
    $region33: #{model_nn_forward.1} parent=1 // pred_fallthru
      _
    %148 = vsyncpa [#allocation3], 1
    %149 = vsyncpa [#allocation6], 1
    %150 = vsyncpa [#allocation4], 1

</llo_original>
